<compile_context>
chip_gen: v7x
topology: tpu7x:2x2x1
jax: 0.10.0
libtpu: 0.0.40
codegen_flags: <defaults>
</compile_context>

<pallas_src>
import functools

import jax
import jax.numpy as jnp
from jax import lax
from jax.experimental import pallas as pl
from jax.experimental.pallas import tpu as pltpu

_EPS = 1e-12          # F.normalize default eps
_TM_MAX = 256         # row-tile cap
_TN_MAX = 256         # out-column tile cap (always a multiple of 128)


def _round_up(v, m):
    return ((v + m - 1) // m) * m


def _row_tile(n):
    return _TM_MAX if n >= _TM_MAX else _round_up(n, 8)


def _col_tile(c):
    return min(_TN_MAX, _round_up(c, 128))


# --------------------------------------------------------------------------
# NormedLinear:  out = scale * (normalize(x, dim=1) @ normalize(w, dim=0))
# --------------------------------------------------------------------------
def _normed_linear_kernel(scale, x_ref, w_ref, icol_ref, o_ref):
    x = x_ref[...]
    # Row sum-of-squares accumulated in f32; the MXU matmul below consumes the
    # raw (un-normalized, un-upcast) operands -- no normalized copies built.
    xf = x.astype(jnp.float32)
    row_ss = jnp.sum(xf * xf, axis=1, keepdims=True)
    inv_row = lax.rsqrt(jnp.maximum(row_ss, _EPS * _EPS))  # == 1/max(||row||, eps)

    acc = jnp.dot(x, w_ref[...], preferred_element_type=jnp.float32)
    # Diagonal row/col scaling commutes with the matmul; fold the 10x in too.
    o_ref[...] = (acc * (inv_row * scale) * icol_ref[...]).astype(o_ref.dtype)


def normed_linear(x, weight, scale=10.0):
    n, c_in = x.shape
    c_in_w, c_out = weight.shape
    assert c_in == c_in_w

    tm = _row_tile(n)
    tn = _col_tile(c_out)
    n_pad = _round_up(n, tm)
    c_out_pad = _round_up(c_out, tn)

    # Inverse column norms (1, C_out): computed once here (tiny XLA reduction)
    # instead of re-reducing the full weight tile inside every row tile.
    w32 = weight.astype(jnp.float32)
    inv_col = lax.rsqrt(
        jnp.maximum(jnp.sum(w32 * w32, axis=0, keepdims=True), _EPS * _EPS))

    x_p = jnp.pad(x, ((0, n_pad - n), (0, 0))) if n_pad != n else x
    w_p = weight
    if c_out_pad != c_out:
        w_p = jnp.pad(w_p, ((0, 0), (0, c_out_pad - c_out)))
        inv_col = jnp.pad(inv_col, ((0, 0), (0, c_out_pad - c_out)))

    out = pl.pallas_call(
        functools.partial(_normed_linear_kernel, float(scale)),
        out_shape=jax.ShapeDtypeStruct((n_pad, c_out_pad), x.dtype),
        grid_spec=pltpu.PrefetchScalarGridSpec(
            num_scalar_prefetch=0,
            grid=(n_pad // tm, c_out_pad // tn),
            in_specs=[
                pl.BlockSpec((tm, c_in), lambda i, j: (i, 0)),
                pl.BlockSpec((c_in, tn), lambda i, j: (0, j)),
                pl.BlockSpec((1, tn), lambda i, j: (0, j)),
            ],
            out_specs=pl.BlockSpec((tm, tn), lambda i, j: (i, j)),
        ),
        compiler_params=pltpu.CompilerParams(
            dimension_semantics=("parallel", "parallel")),
    )(x_p, w_p, inv_col)
    return out[:n, :c_out]


# --------------------------------------------------------------------------
# SAGEConv dense part:  out = aggr @ W_l^T + x @ W_r^T + b
# --------------------------------------------------------------------------
def _sage_linear_kernel(aggr_ref, x_ref, wl_ref, wr_ref, b_ref, o_ref):
    acc = jnp.dot(aggr_ref[...], wl_ref[...], preferred_element_type=jnp.float32)
    acc = acc + jnp.dot(x_ref[...], wr_ref[...], preferred_element_type=jnp.float32)
    o_ref[...] = (acc + b_ref[...].astype(jnp.float32)).astype(o_ref.dtype)


def sage_linear(aggr, x, wl_t, wr_t, bias):
    n, c_in = x.shape
    c_out = wl_t.shape[1]

    tm = _row_tile(n)
    tn = _col_tile(c_out)
    n_pad = _round_up(n, tm)
    c_out_pad = _round_up(c_out, tn)

    aggr_p = jnp.pad(aggr, ((0, n_pad - n), (0, 0))) if n_pad != n else aggr
    x_p = jnp.pad(x, ((0, n_pad - n), (0, 0))) if n_pad != n else x
    b2 = bias.reshape(1, c_out)
    wl_p, wr_p = wl_t, wr_t
    if c_out_pad != c_out:
        wl_p = jnp.pad(wl_p, ((0, 0), (0, c_out_pad - c_out)))
        wr_p = jnp.pad(wr_p, ((0, 0), (0, c_out_pad - c_out)))
        b2 = jnp.pad(b2, ((0, 0), (0, c_out_pad - c_out)))

    out = pl.pallas_call(
        _sage_linear_kernel,
        out_shape=jax.ShapeDtypeStruct((n_pad, c_out_pad), x.dtype),
        grid_spec=pltpu.PrefetchScalarGridSpec(
            num_scalar_prefetch=0,
            grid=(n_pad // tm, c_out_pad // tn),
            in_specs=[
                pl.BlockSpec((tm, c_in), lambda i, j: (i, 0)),
                pl.BlockSpec((tm, c_in), lambda i, j: (i, 0)),
                pl.BlockSpec((c_in, tn), lambda i, j: (0, j)),
                pl.BlockSpec((c_in, tn), lambda i, j: (0, j)),
                pl.BlockSpec((1, tn), lambda i, j: (0, j)),
            ],
            out_specs=pl.BlockSpec((tm, tn), lambda i, j: (i, j)),
        ),
        compiler_params=pltpu.CompilerParams(
            dimension_semantics=("parallel", "parallel")),
    )(aggr_p, x_p, wl_p, wr_p, b2)
    return out[:n, :c_out]


# --------------------------------------------------------------------------
# Encoder_modified forward
# --------------------------------------------------------------------------
def encoder_modified_forward(x, edge_index, wl_t, wr_t, bias, w1, w2):
    n = x.shape[0]
    src, dst = edge_index[0], edge_index[1]
    # TODO(synk): SAGEConv's mean aggregation is a data-dependent gather/scatter
    # over edge_index; it stays in XLA (a Pallas version needs manual DMA gather).
    msg = x[src]
    summed = jnp.zeros_like(x).at[dst].add(msg)
    deg = jnp.zeros((n,), x.dtype).at[dst].add(1.0)
    aggr = summed / jnp.maximum(deg, 1.0)[:, None]

    out_feat = sage_linear(aggr, x, wl_t, wr_t, bias)       # x1
    out1 = normed_linear(out_feat, w1, scale=10.0)
    out2 = normed_linear(out_feat, w2, scale=10.0)
    return out1, out2, out_feat


def init_weight(key, in_features, out_features):
    """Mimic: uniform_(-1, 1).renorm_(2, 1, 1e-5).mul_(1e5)."""
    w = jax.random.uniform(
        key, (in_features, out_features), jnp.float32, minval=-1.0, maxval=1.0)
    col_norm = jnp.sqrt(jnp.sum(w * w, axis=0, keepdims=True))
    scale = jnp.where(col_norm > 1e-5, 1e-5 / (col_norm + 1e-7), 1.0)
    return w * scale * 1e5


def _reference(x, edge_index, wl_t, wr_t, bias, w1, w2):
    n = x.shape[0]
    src, dst = edge_index[0], edge_index[1]
    msg = x[src]
    summed = jnp.zeros_like(x).at[dst].add(msg)
    deg = jnp.zeros((n,), x.dtype).at[dst].add(1.0)
    aggr = summed / jnp.maximum(deg, 1.0)[:, None]
    x1 = aggr @ wl_t + x @ wr_t + bias[None, :]

    def nl(h, w):
        hn = h / jnp.maximum(jnp.sqrt(jnp.sum(h * h, axis=1, keepdims=True)), _EPS)
        wn = w / jnp.maximum(jnp.sqrt(jnp.sum(w * w, axis=0, keepdims=True)), _EPS)
        return 10.0 * (hn @ wn)

    return nl(x1, w1), nl(x1, w2), x1


if __name__ == "__main__":
    key = jax.random.PRNGKey(0)
    kx, ke1, ke2, kl, kr, kb, k1, k2 = jax.random.split(key, 8)

    num_nodes, x_dim = 16, 32
    shared_classes, total_classes = 8, 12
    num_edges = 48

    x = jax.random.normal(kx, (num_nodes, x_dim), jnp.float32)
    src = jax.random.randint(ke1, (num_edges,), 0, num_nodes)
    dst = jax.random.randint(ke2, (num_edges,), 0, num_nodes)
    edge_index = jnp.stack([src, dst])

    # SAGEConv parameters (W^T layout so the kernel does x @ W^T directly).
    wl_t = jax.random.normal(kl, (x_dim, x_dim), jnp.float32) / jnp.sqrt(float(x_dim))
    wr_t = jax.random.normal(kr, (x_dim, x_dim), jnp.float32) / jnp.sqrt(float(x_dim))
    bias = jax.random.normal(kb, (x_dim,), jnp.float32) * 0.1

    # NormedLinear weights.
    w1 = init_weight(k1, x_dim, shared_classes)
    w2 = init_weight(k2, x_dim, total_classes)

    fwd = jax.jit(encoder_modified_forward)
    out1, out2, out_feat = fwd(x, edge_index, wl_t, wr_t, bias, w1, w2)
    out1, out2, out_feat = jax.block_until_ready((out1, out2, out_feat))

    r1, r2, rfeat = _reference(x, edge_index, wl_t, wr_t, bias, w1, w2)

    assert out1.shape == (num_nodes, shared_classes)
    assert out2.shape == (num_nodes, total_classes)
    assert out_feat.shape == (num_nodes, x_dim)
    assert jnp.allclose(out_feat, rfeat, atol=1e-3, rtol=1e-3)
    assert jnp.allclose(out1, r1, atol=1e-3, rtol=1e-3)
    assert jnp.allclose(out2, r2, atol=1e-3, rtol=1e-3)

    print("KERNEL_OK")
</pallas_src>

<mosaic_0001>
module attributes {stable_mosaic.version = 11 : i64} {
  func.func private @main(%arg0: i32) attributes {dimension_semantics = [#tpu.dimension_semantics<core_parallel>], iteration_bounds = array<i64: 2>, tpu.core_type = #tpu.core_type<sc_scalar_subcore>, window_params = []} {
    return
  }
}

module attributes {stable_mosaic.version = 11 : i64} {
  func.func private @main(%arg0: i32) attributes {dimension_semantics = [#tpu.dimension_semantics<core_parallel>], iteration_bounds = array<i64: 2>, tpu.core_type = #tpu.core_type<sc_scalar_subcore>, window_params = []} {
    return
  }
}

module attributes {stable_mosaic.version = 11 : i64} {
  func.func @_sage_linear_kernel(%arg0: i32, %arg1: i32, %arg2: memref<16x32xf32, #tpu.memory_space<vmem>>, %arg3: memref<16x32xf32, #tpu.memory_space<vmem>>, %arg4: memref<32x128xf32, #tpu.memory_space<vmem>>, %arg5: memref<32x128xf32, #tpu.memory_space<vmem>>, %arg6: memref<1x128xf32, #tpu.memory_space<vmem>>, %arg7: memref<16x128xf32, #tpu.memory_space<vmem>>) attributes {dimension_semantics = [#tpu.dimension_semantics<parallel>, #tpu.dimension_semantics<parallel>], iteration_bounds = array<i64: 1, 1>, scalar_prefetch = 0 : i64, scratch_operands = 0 : i64, tpu.core_type = #tpu.core_type<tc>, window_params = [{transform_indices = @transform_0, window_bounds = array<i64: 16, 32>}, {transform_indices = @transform_1, window_bounds = array<i64: 16, 32>}, {transform_indices = @transform_2, window_bounds = array<i64: 32, 128>}, {transform_indices = @transform_3, window_bounds = array<i64: 32, 128>}, {transform_indices = @transform_4, window_bounds = array<i64: 1, 128>}, {transform_indices = @transform_5, window_bounds = array<i64: 16, 128>}]} {
    %c0 = arith.constant 0 : index
    %c0_0 = arith.constant 0 : index
    %0 = vector.load %arg2[%c0, %c0_0] : memref<16x32xf32, #tpu.memory_space<vmem>>, vector<16x32xf32>
    %c0_1 = arith.constant 0 : index
    %c0_2 = arith.constant 0 : index
    %1 = vector.load %arg4[%c0_1, %c0_2] : memref<32x128xf32, #tpu.memory_space<vmem>>, vector<32x128xf32>
    %cst = arith.constant dense<0.000000e+00> : vector<16x128xf32>
    %2 = tpu.matmul %0, %1, %cst {dimension_numbers = #tpu.dot_dimension_numbers<[1], [0], [0], [1], [0, 0, 1, 1], [], []>} : vector<16x32xf32>, vector<32x128xf32>, vector<16x128xf32> -> vector<16x128xf32>
    %c0_3 = arith.constant 0 : index
    %c0_4 = arith.constant 0 : index
    %3 = vector.load %arg3[%c0_3, %c0_4] : memref<16x32xf32, #tpu.memory_space<vmem>>, vector<16x32xf32>
    %c0_5 = arith.constant 0 : index
    %c0_6 = arith.constant 0 : index
    %4 = vector.load %arg5[%c0_5, %c0_6] : memref<32x128xf32, #tpu.memory_space<vmem>>, vector<32x128xf32>
    %cst_7 = arith.constant dense<0.000000e+00> : vector<16x128xf32>
    %5 = tpu.matmul %3, %4, %cst_7 {dimension_numbers = #tpu.dot_dimension_numbers<[1], [0], [0], [1], [0, 0, 1, 1], [], []>} : vector<16x32xf32>, vector<32x128xf32>, vector<16x128xf32> -> vector<16x128xf32>
    %6 = arith.addf %2, %5 : vector<16x128xf32>
    %c0_8 = arith.constant 0 : index
    %c0_9 = arith.constant 0 : index
    %7 = vector.load %arg6[%c0_8, %c0_9] : memref<1x128xf32, #tpu.memory_space<vmem>>, vector<1x128xf32>
    %8 = vector.broadcast %7 : vector<1x128xf32> to vector<16x128xf32>
    %9 = arith.addf %6, %8 : vector<16x128xf32>
    %c0_10 = arith.constant 0 : index
    %c0_11 = arith.constant 0 : index
    %10 = vector.load %arg7[%c0_10, %c0_11] : memref<16x128xf32, #tpu.memory_space<vmem>>, vector<16x128xf32>
    tpu.vector_store %arg7[%c0_10, %c0_11], %9 {strides = array<i32>} : memref<16x128xf32, #tpu.memory_space<vmem>>, vector<16x128xf32>,
    return
  }
  func.func @transform_0(%arg0: i32, %arg1: i32) -> (i32, i32) {
    %c0_i32 = arith.constant 0 : i32
    %c0_i32_0 = arith.constant 0 : i32
    return %arg0, %c0_i32 : i32, i32
  }
  func.func @transform_1(%arg0: i32, %arg1: i32) -> (i32, i32) {
    %c0_i32 = arith.constant 0 : i32
    %c0_i32_0 = arith.constant 0 : i32
    return %arg0, %c0_i32 : i32, i32
  }
  func.func @transform_2(%arg0: i32, %arg1: i32) -> (i32, i32) {
    %c0_i32 = arith.constant 0 : i32
    %c0_i32_0 = arith.constant 0 : i32
    return %c0_i32, %arg1 : i32, i32
  }
  func.func @transform_3(%arg0: i32, %arg1: i32) -> (i32, i32) {
    %c0_i32 = arith.constant 0 : i32
    %c0_i32_0 = arith.constant 0 : i32
    return %c0_i32, %arg1 : i32, i32
  }
  func.func @transform_4(%arg0: i32, %arg1: i32) -> (i32, i32) {
    %c0_i32 = arith.constant 0 : i32
    %c0_i32_0 = arith.constant 0 : i32
    return %c0_i32, %arg1 : i32, i32
  }
  func.func @transform_5(%arg0: i32, %arg1: i32) -> (i32, i32) {
    %c0_i32 = arith.constant 0 : i32
    return %arg0, %arg1 : i32, i32
  }
}

module attributes {stable_mosaic.version = 11 : i64} {
  func.func @_normed_linear_kernel(%arg0: i32, %arg1: i32, %arg2: memref<16x32xf32, #tpu.memory_space<vmem>>, %arg3: memref<32x128xf32, #tpu.memory_space<vmem>>, %arg4: memref<1x128xf32, #tpu.memory_space<vmem>>, %arg5: memref<16x128xf32, #tpu.memory_space<vmem>>) attributes {dimension_semantics = [#tpu.dimension_semantics<parallel>, #tpu.dimension_semantics<parallel>], iteration_bounds = array<i64: 1, 1>, scalar_prefetch = 0 : i64, scratch_operands = 0 : i64, tpu.core_type = #tpu.core_type<tc>, window_params = [{transform_indices = @transform_0, window_bounds = array<i64: 16, 32>}, {transform_indices = @transform_1, window_bounds = array<i64: 32, 128>}, {transform_indices = @transform_2, window_bounds = array<i64: 1, 128>}, {transform_indices = @transform_3, window_bounds = array<i64: 16, 128>}]} {
    %c0 = arith.constant 0 : index
    %c0_0 = arith.constant 0 : index
    %0 = vector.load %arg2[%c0, %c0_0] : memref<16x32xf32, #tpu.memory_space<vmem>>, vector<16x32xf32>
    %1 = arith.mulf %0, %0 : vector<16x32xf32>
    %cst = arith.constant dense<0.000000e+00> : vector<16xf32>
    %2 = vector.multi_reduction <add>, %1, %cst [1] : vector<16x32xf32> to vector<16xf32>
    %3 = vector.shape_cast %2 : vector<16xf32> to vector<16x1xf32>
    %cst_1 = arith.constant 1.000000e-24 : f32
    %4 = vector.broadcast %cst_1 : f32 to vector<16x1xf32>
    %5 = arith.maximumf %3, %4 : vector<16x1xf32>
    %6 = math.rsqrt %5 : vector<16x1xf32>
    %c0_2 = arith.constant 0 : index
    %c0_3 = arith.constant 0 : index
    %7 = vector.load %arg3[%c0_2, %c0_3] : memref<32x128xf32, #tpu.memory_space<vmem>>, vector<32x128xf32>
    %cst_4 = arith.constant dense<0.000000e+00> : vector<16x128xf32>
    %8 = tpu.matmul %0, %7, %cst_4 {dimension_numbers = #tpu.dot_dimension_numbers<[1], [0], [0], [1], [0, 0, 1, 1], [], []>} : vector<16x32xf32>, vector<32x128xf32>, vector<16x128xf32> -> vector<16x128xf32>
    %cst_5 = arith.constant 1.000000e+01 : f32
    %9 = vector.broadcast %cst_5 : f32 to vector<16x1xf32>
    %10 = arith.mulf %6, %9 : vector<16x1xf32>
    %11 = vector.broadcast %10 : vector<16x1xf32> to vector<16x128xf32>
    %12 = arith.mulf %8, %11 : vector<16x128xf32>
    %c0_6 = arith.constant 0 : index
    %c0_7 = arith.constant 0 : index
    %13 = vector.load %arg4[%c0_6, %c0_7] : memref<1x128xf32, #tpu.memory_space<vmem>>, vector<1x128xf32>
    %14 = vector.broadcast %13 : vector<1x128xf32> to vector<16x128xf32>
    %15 = arith.mulf %12, %14 : vector<16x128xf32>
    %c0_8 = arith.constant 0 : index
    %c0_9 = arith.constant 0 : index
    %16 = vector.load %arg5[%c0_8, %c0_9] : memref<16x128xf32, #tpu.memory_space<vmem>>, vector<16x128xf32>
    tpu.vector_store %arg5[%c0_8, %c0_9], %15 {strides = array<i32>} : memref<16x128xf32, #tpu.memory_space<vmem>>, vector<16x128xf32>,
    return
  }
  func.func @transform_0(%arg0: i32, %arg1: i32) -> (i32, i32) {
    %c0_i32 = arith.constant 0 : i32
    %c0_i32_0 = arith.constant 0 : i32
    return %arg0, %c0_i32 : i32, i32
  }
  func.func @transform_1(%arg0: i32, %arg1: i32) -> (i32, i32) {
    %c0_i32 = arith.constant 0 : i32
    %c0_i32_0 = arith.constant 0 : i32
    return %c0_i32, %arg1 : i32, i32
  }
  func.func @transform_2(%arg0: i32, %arg1: i32) -> (i32, i32) {
    %c0_i32 = arith.constant 0 : i32
    %c0_i32_0 = arith.constant 0 : i32
    return %c0_i32, %arg1 : i32, i32
  }
  func.func @transform_3(%arg0: i32, %arg1: i32) -> (i32, i32) {
    %c0_i32 = arith.constant 0 : i32
    return %arg0, %arg1 : i32, i32
  }
}

module attributes {stable_mosaic.version = 11 : i64} {
  func.func @_normed_linear_kernel(%arg0: i32, %arg1: i32, %arg2: memref<16x32xf32, #tpu.memory_space<vmem>>, %arg3: memref<32x128xf32, #tpu.memory_space<vmem>>, %arg4: memref<1x128xf32, #tpu.memory_space<vmem>>, %arg5: memref<16x128xf32, #tpu.memory_space<vmem>>) attributes {dimension_semantics = [#tpu.dimension_semantics<parallel>, #tpu.dimension_semantics<parallel>], iteration_bounds = array<i64: 1, 1>, scalar_prefetch = 0 : i64, scratch_operands = 0 : i64, tpu.core_type = #tpu.core_type<tc>, window_params = [{transform_indices = @transform_0, window_bounds = array<i64: 16, 32>}, {transform_indices = @transform_1, window_bounds = array<i64: 32, 128>}, {transform_indices = @transform_2, window_bounds = array<i64: 1, 128>}, {transform_indices = @transform_3, window_bounds = array<i64: 16, 128>}]} {
    %c0 = arith.constant 0 : index
    %c0_0 = arith.constant 0 : index
    %0 = vector.load %arg2[%c0, %c0_0] : memref<16x32xf32, #tpu.memory_space<vmem>>, vector<16x32xf32>
    %1 = arith.mulf %0, %0 : vector<16x32xf32>
    %cst = arith.constant dense<0.000000e+00> : vector<16xf32>
    %2 = vector.multi_reduction <add>, %1, %cst [1] : vector<16x32xf32> to vector<16xf32>
    %3 = vector.shape_cast %2 : vector<16xf32> to vector<16x1xf32>
    %cst_1 = arith.constant 1.000000e-24 : f32
    %4 = vector.broadcast %cst_1 : f32 to vector<16x1xf32>
    %5 = arith.maximumf %3, %4 : vector<16x1xf32>
    %6 = math.rsqrt %5 : vector<16x1xf32>
    %c0_2 = arith.constant 0 : index
    %c0_3 = arith.constant 0 : index
    %7 = vector.load %arg3[%c0_2, %c0_3] : memref<32x128xf32, #tpu.memory_space<vmem>>, vector<32x128xf32>
    %cst_4 = arith.constant dense<0.000000e+00> : vector<16x128xf32>
    %8 = tpu.matmul %0, %7, %cst_4 {dimension_numbers = #tpu.dot_dimension_numbers<[1], [0], [0], [1], [0, 0, 1, 1], [], []>} : vector<16x32xf32>, vector<32x128xf32>, vector<16x128xf32> -> vector<16x128xf32>
    %cst_5 = arith.constant 1.000000e+01 : f32
    %9 = vector.broadcast %cst_5 : f32 to vector<16x1xf32>
    %10 = arith.mulf %6, %9 : vector<16x1xf32>
    %11 = vector.broadcast %10 : vector<16x1xf32> to vector<16x128xf32>
    %12 = arith.mulf %8, %11 : vector<16x128xf32>
    %c0_6 = arith.constant 0 : index
    %c0_7 = arith.constant 0 : index
    %13 = vector.load %arg4[%c0_6, %c0_7] : memref<1x128xf32, #tpu.memory_space<vmem>>, vector<1x128xf32>
    %14 = vector.broadcast %13 : vector<1x128xf32> to vector<16x128xf32>
    %15 = arith.mulf %12, %14 : vector<16x128xf32>
    %c0_8 = arith.constant 0 : index
    %c0_9 = arith.constant 0 : index
    %16 = vector.load %arg5[%c0_8, %c0_9] : memref<16x128xf32, #tpu.memory_space<vmem>>, vector<16x128xf32>
    tpu.vector_store %arg5[%c0_8, %c0_9], %15 {strides = array<i32>} : memref<16x128xf32, #tpu.memory_space<vmem>>, vector<16x128xf32>,
    return
  }
  func.func @transform_0(%arg0: i32, %arg1: i32) -> (i32, i32) {
    %c0_i32 = arith.constant 0 : i32
    %c0_i32_0 = arith.constant 0 : i32
    return %arg0, %c0_i32 : i32, i32
  }
  func.func @transform_1(%arg0: i32, %arg1: i32) -> (i32, i32) {
    %c0_i32 = arith.constant 0 : i32
    %c0_i32_0 = arith.constant 0 : i32
    return %c0_i32, %arg1 : i32, i32
  }
  func.func @transform_2(%arg0: i32, %arg1: i32) -> (i32, i32) {
    %c0_i32 = arith.constant 0 : i32
    %c0_i32_0 = arith.constant 0 : i32
    return %c0_i32, %arg1 : i32, i32
  }
  func.func @transform_3(%arg0: i32, %arg1: i32) -> (i32, i32) {
    %c0_i32 = arith.constant 0 : i32
    return %arg0, %arg1 : i32, i32
  }
}

</mosaic_0001>

<llo_original>
// kernel: encoder_modified_forward.3
$region0: #{encoder_modified_forward.3}
  #allocation0 [shape = 'u32[]', space=smem, size = 0x4, offset = 0x4, fixed_abs, tag = 'smem constant byte address 0x4 - core index']
  #allocation1 [shape = 'u32[144,128]{1,0:T(1,128)}', space=vmem, size = 0x12000, scoped, tag = 'internal scratch']
  %s0 = inlined_call_operand.vmem [shape: f32[16,32], index: 0, kind: input, shape index: {}]
  %s1 = inlined_call_operand.vmem [shape: f32[16,32], index: 1, kind: input, shape index: {}]
  %s2 = inlined_call_operand.vmem [shape: f32[32,128], index: 2, kind: input, shape index: {}]
  %s3 = inlined_call_operand.vmem [shape: f32[32,128], index: 3, kind: input, shape index: {}]
  %s4 = inlined_call_operand.vmem [shape: f32[1,128], index: 4, kind: input, shape index: {}]
  %s5 = inlined_call_operand.vmem [shape: f32[16,128], index: 5, kind: output, shape index: {}]
  %s6 = sld [smem:[#allocation0]]
  $region30: #{encoder_modified_forward.3} parent=0
    _
  %s8 = ssub.s32 1, %s6
  %s9 = scalar_select 0, %s8, %s6
  // Predicated region
  $region2: #{encoder_modified_forward.3} parent=0 // pred_check
    _
  $region3: #{encoder_modified_forward.3} parent=0 // pred_check_branch
    %11 = sbr.rel (0) target = $region5
  $region4: #{encoder_modified_forward.3} parent=0 // pred_region
    _
  $region5: #{encoder_modified_forward.3} parent=0 // pred_fallthru
    _
  // Predicated region
  $region6: #{encoder_modified_forward.3} parent=0 // pred_check
    _
  $region7: #{encoder_modified_forward.3} parent=0 // pred_check_branch
    %13 = sbr.rel (0) target = $region9
  $region8: #{encoder_modified_forward.3} parent=0 // pred_region
    _
  $region9: #{encoder_modified_forward.3} parent=0 // pred_fallthru
    _
  // Predicated region
  $region10: #{encoder_modified_forward.3} parent=0 // pred_check
    _
  $region11: #{encoder_modified_forward.3} parent=0 // pred_check_branch
    %15 = sbr.rel (0) target = $region13
  $region12: #{encoder_modified_forward.3} parent=0 // pred_region
    _
  $region13: #{encoder_modified_forward.3} parent=0 // pred_fallthru
    _
  // Predicated region
  $region14: #{encoder_modified_forward.3} parent=0 // pred_check
    _
  $region15: #{encoder_modified_forward.3} parent=0 // pred_check_branch
    %17 = sbr.rel (0) target = $region17
  $region16: #{encoder_modified_forward.3} parent=0 // pred_region
    _
  $region17: #{encoder_modified_forward.3} parent=0 // pred_fallthru
    _
  // Predicated region
  $region18: #{encoder_modified_forward.3} parent=0 // pred_check
    _
  $region19: #{encoder_modified_forward.3} parent=0 // pred_check_branch
    %19 = sbr.rel (0) target = $region21
  $region20: #{encoder_modified_forward.3} parent=0 // pred_region
    _
  $region21: #{encoder_modified_forward.3} parent=0 // pred_fallthru
    _
  %v20 = vld [vmem:[%s0] sm:$0xff]
  %v21 = vld [vmem:[%s0 + $0x8] sm:$0xff]
  %v22 = vld [vmem:[%s2] sm:$0xff]
  %v23 = vld [vmem:[%s2 + $0x8] sm:$0xff]
  %v24 = vld [vmem:[%s2 + $0x10] sm:$0xff]
  %v25 = vld [vmem:[%s2 + $0x18] sm:$0xff]
  %v26 = vld [vmem:[%s1] sm:$0xff]
  %v27 = vld [vmem:[%s1 + $0x8] sm:$0xff]
  %v28 = vld [vmem:[%s3] sm:$0xff]
  %v29 = vld [vmem:[%s3 + $0x8] sm:$0xff]
  %v30 = vld [vmem:[%s3 + $0x10] sm:$0xff]
  %v31 = vld [vmem:[%s3 + $0x18] sm:$0xff]
  %vm32 = vcmask 261120
  %v34 = vsel %vm32, %v26, 0
  %v37 = vsel %vm32, %v27, 0
  %39 = vmatprep.subr.mxu0 0.0
  %40 = vmatpush1.msra.mxu0 %v28
  %41 = vmatprep.subr.mxu0 0.0
  %42 = vmatpush1.msra.mxu0 %v29
  %43 = vmatprep.subr.mxu0 0.0
  %44 = vmatpush1.msra.mxu0 %v30
  %45 = vmatprep.subr.mxu0 0.0
  %46 = vmatpush1.msra.mxu0 %v31
  %47 = vmatprep.subr.mxu0 0.0
  %48 = vmatpush1.msra.mxu0 0.0
  %49 = vmatprep.subr.mxu0 0.0
  %50 = vmatpush1.msra.mxu0 0.0
  %51 = vmatprep.subr.mxu0 0.0
  %52 = vmatpush1.msra.mxu0 0.0
  %53 = vmatprep.subr.mxu0 0.0
  %54 = vmatpush1.msra.mxu0 0.0
  %55 = vmatprep.subr.mxu0 0.0
  %56 = vmatpush1.msra.mxu0 0.0
  %57 = vmatprep.subr.mxu0 0.0
  %58 = vmatpush1.msra.mxu0 0.0
  %59 = vmatprep.subr.mxu0 0.0
  %60 = vmatpush1.msra.mxu0 0.0
  %61 = vmatprep.subr.mxu0 0.0
  %62 = vmatpush1.msra.mxu0 0.0
  %63 = vmatprep.subr.mxu0 0.0
  %64 = vmatpush1.msra.mxu0 0.0
  %65 = vmatprep.subr.mxu0 0.0
  %66 = vmatpush1.msra.mxu0 0.0
  %67 = vmatprep.subr.mxu0 0.0
  %68 = vmatpush1.msra.mxu0 0.0
  %69 = vmatprep.subr.mxu0 0.0
  %70 = vmatpush1.msra.mxu0 0.0
  %71 = vmatprep.subr.mxu0 0.0
  %72 = vmatpush1.msra.mxu0 0.0
  %73 = vmatprep.subr.mxu0 0.0
  %74 = vmatpush1.msra.mxu0 0.0
  %75 = vmatprep.subr.mxu0 0.0
  %76 = vmatpush1.msra.mxu0 0.0
  %77 = vmatprep.subr.mxu0 0.0
  %78 = vmatpush1.msra.mxu0 0.0
  %79 = vmatprep.subr.mxu0 0.0
  %80 = vmatpush1.msra.mxu0 0.0
  %81 = vmatprep.subr.mxu0 0.0
  %82 = vmatpush1.msra.mxu0 0.0
  %83 = vmatprep.subr.mxu0 0.0
  %84 = vmatpush1.msra.mxu0 0.0
  %85 = vmatprep.subr.mxu0 0.0
  %86 = vmatpush1.msra.mxu0 0.0
  %87 = vmatprep.subr.mxu0 0.0
  %88 = vmatpush1.msra.mxu0 0.0
  %89 = vmatprep.subr.mxu0 0.0
  %90 = vmatpush1.msra.mxu0 0.0
  %91 = vmatprep.subr.mxu0 0.0
  %92 = vmatpush1.msra.mxu0 0.0
  %93 = vmatprep.subr.mxu0 0.0
  %94 = vmatpush1.msra.mxu0 0.0
  %95 = vmatprep.subr.mxu0 0.0
  %96 = vmatpush1.msra.mxu0 0.0
  %97 = vmatprep.subr.mxu0 0.0
  %98 = vmatpush1.msra.mxu0 0.0
  %99 = vmatprep.subr.mxu0 0.0
  %100 = vmatpush1.msra.mxu0 0.0
  %101 = vmatprep.subr.mxu0 0.0
  %102 = vmatpush1.msra.mxu0 0.0
  %103 = vmatprep.mubr.f32.mxu0 0.0
  %104 = vmatmul.mubr.f32.gmra.mrb[0].mxu0 %v34
  %v105 = vpop.f32.mrb[0].mxu0
  %v106 = vadd.f32 0.0, %v105
  %v107 = vpop.f32.mrb[0].mxu0
  %108 = vmatprep.mubr.f32.mxu0 0.0
  %109 = vmatmul.mubr.f32.gmra.mrb[0].mxu0 %v37
  %v110 = vpop.f32.mrb[0].mxu0
  %v111 = vadd.f32 0.0, %v110
  %v112 = vpop.f32.mrb[0].mxu0
  %113 = vdwg.mxu0
  %v115 = vsel %vm32, %v20, 0
  %v118 = vsel %vm32, %v21, 0
  %120 = vmatprep.subr.mxu0 0.0
  %121 = vmatpush1.msra.mxu0 %v22
  %122 = vmatprep.subr.mxu0 0.0
  %123 = vmatpush1.msra.mxu0 %v23
  %124 = vmatprep.subr.mxu0 0.0
  %125 = vmatpush1.msra.mxu0 %v24
  %126 = vmatprep.subr.mxu0 0.0
  %127 = vmatpush1.msra.mxu0 %v25
  %128 = vmatprep.subr.mxu0 0.0
  %129 = vmatpush1.msra.mxu0 0.0
  %130 = vmatprep.subr.mxu0 0.0
  %131 = vmatpush1.msra.mxu0 0.0
  %132 = vmatprep.subr.mxu0 0.0
  %133 = vmatpush1.msra.mxu0 0.0
  %134 = vmatprep.subr.mxu0 0.0
  %135 = vmatpush1.msra.mxu0 0.0
  %136 = vmatprep.subr.mxu0 0.0
  %137 = vmatpush1.msra.mxu0 0.0
  %138 = vmatprep.subr.mxu0 0.0
  %139 = vmatpush1.msra.mxu0 0.0
  %140 = vmatprep.subr.mxu0 0.0
  %141 = vmatpush1.msra.mxu0 0.0
  %142 = vmatprep.subr.mxu0 0.0
  %143 = vmatpush1.msra.mxu0 0.0
  %144 = vmatprep.subr.mxu0 0.0
  %145 = vmatpush1.msra.mxu0 0.0
  %146 = vmatprep.subr.mxu0 0.0
  %147 = vmatpush1.msra.mxu0 0.0
  %148 = vmatprep.subr.mxu0 0.0
  %149 = vmatpush1.msra.mxu0 0.0
  %150 = vmatprep.subr.mxu0 0.0
  %151 = vmatpush1.msra.mxu0 0.0
  %152 = vmatprep.subr.mxu0 0.0
  %153 = vmatpush1.msra.mxu0 0.0
  %154 = vmatprep.subr.mxu0 0.0
  %155 = vmatpush1.msra.mxu0 0.0
  %156 = vmatprep.subr.mxu0 0.0
  %157 = vmatpush1.msra.mxu0 0.0
  %158 = vmatprep.subr.mxu0 0.0
  %159 = vmatpush1.msra.mxu0 0.0
  %160 = vmatprep.subr.mxu0 0.0
  %161 = vmatpush1.msra.mxu0 0.0
  %162 = vmatprep.subr.mxu0 0.0
  %163 = vmatpush1.msra.mxu0 0.0
  %164 = vmatprep.subr.mxu0 0.0
  %165 = vmatpush1.msra.mxu0 0.0
  %166 = vmatprep.subr.mxu0 0.0
  %167 = vmatpush1.msra.mxu0 0.0
  %168 = vmatprep.subr.mxu0 0.0
  %169 = vmatpush1.msra.mxu0 0.0
  %170 = vmatprep.subr.mxu0 0.0
  %171 = vmatpush1.msra.mxu0 0.0
  %172 = vmatprep.subr.mxu0 0.0
  %173 = vmatpush1.msra.mxu0 0.0
  %174 = vmatprep.subr.mxu0 0.0
  %175 = vmatpush1.msra.mxu0 0.0
  %176 = vmatprep.subr.mxu0 0.0
  %177 = vmatpush1.msra.mxu0 0.0
  %178 = vmatprep.subr.mxu0 0.0
  %179 = vmatpush1.msra.mxu0 0.0
  %180 = vmatprep.subr.mxu0 0.0
  %181 = vmatpush1.msra.mxu0 0.0
  %182 = vmatprep.subr.mxu0 0.0
  %183 = vmatpush1.msra.mxu0 0.0
  %184 = vmatprep.mubr.f32.mxu0 0.0
  %185 = vmatmul.mubr.f32.gmra.mrb[0].mxu0 %v115
  %v186 = vpop.f32.mrb[0].mxu0
  %v187 = vadd.f32 %v106, %v186
  %v188 = vpop.f32.mrb[0].mxu0
  %189 = vmatprep.mubr.f32.mxu0 0.0
  %190 = vmatmul.mubr.f32.gmra.mrb[0].mxu0 %v118
  %v191 = vpop.f32.mrb[0].mxu0
  %v192 = vadd.f32 %v111, %v191
  %v193 = vpop.f32.mrb[0].mxu0
  %194 = vdwg.mxu0
  %v195 = vld [vmem:[%s4] sm:$0x1]
  %v197 = vlaneseq
  %v198 = vshrl.u32 %v197, 7
  %v199 = vsub.s32 0, %v198
  %v200 = vrot.slane %v195, %v199
  %v202 = vadd.f32 %v187, %v200
  %v203 = vadd.f32 %v192, %v200
  %204 = vst [vmem:[%s5] sm:$0xff] %v202
  %205 = vst [vmem:[%s5 + $0x8] sm:$0xff] %v203
  // Predicated region
  $region22: #{encoder_modified_forward.3} parent=0 // pred_check
    _
  $region23: #{encoder_modified_forward.3} parent=0 // pred_check_branch
    %207 = sbr.rel (0) target = $region25
  $region24: #{encoder_modified_forward.3} parent=0 // pred_region
    _
  $region25: #{encoder_modified_forward.3} parent=0 // pred_fallthru
    _
  // Predicated region
  $region26: #{encoder_modified_forward.3} parent=0 // pred_check
    _
  $region27: #{encoder_modified_forward.3} parent=0 // pred_check_branch
    %209 = sbr.rel (0) target = $region29
  $region28: #{encoder_modified_forward.3} parent=0 // pred_region
    _
  $region29: #{encoder_modified_forward.3} parent=0 // pred_fallthru
    _

// kernel: encoder_modified_forward.4
$region0: #{encoder_modified_forward.4}
  #allocation0 [shape = 'u32[]', space=smem, size = 0x4, offset = 0x4, fixed_abs, tag = 'smem constant byte address 0x4 - core index']
  #allocation1 [shape = 'u32[144,128]{1,0:T(1,128)}', space=vmem, size = 0x12000, scoped, tag = 'internal scratch']
  %s0 = inlined_call_operand.vmem [shape: f32[16,32], index: 0, kind: input, shape index: {}]
  %s1 = inlined_call_operand.vmem [shape: f32[32,128], index: 1, kind: input, shape index: {}]
  %s2 = inlined_call_operand.vmem [shape: f32[1,128], index: 2, kind: input, shape index: {}]
  %s3 = inlined_call_operand.vmem [shape: f32[16,128], index: 3, kind: output, shape index: {}]
  %s4 = sld [smem:[#allocation0]]
  $region22: #{encoder_modified_forward.4} parent=0
    _
  %s6 = ssub.s32 1, %s4
  %s7 = scalar_select 0, %s6, %s4
  // Predicated region
  $region2: #{encoder_modified_forward.4} parent=0 // pred_check
    _
  $region3: #{encoder_modified_forward.4} parent=0 // pred_check_branch
    %9 = sbr.rel (0) target = $region5
  $region4: #{encoder_modified_forward.4} parent=0 // pred_region
    _
  $region5: #{encoder_modified_forward.4} parent=0 // pred_fallthru
    _
  // Predicated region
  $region6: #{encoder_modified_forward.4} parent=0 // pred_check
    _
  $region7: #{encoder_modified_forward.4} parent=0 // pred_check_branch
    %11 = sbr.rel (0) target = $region9
  $region8: #{encoder_modified_forward.4} parent=0 // pred_region
    _
  $region9: #{encoder_modified_forward.4} parent=0 // pred_fallthru
    _
  // Predicated region
  $region10: #{encoder_modified_forward.4} parent=0 // pred_check
    _
  $region11: #{encoder_modified_forward.4} parent=0 // pred_check_branch
    %13 = sbr.rel (0) target = $region13
  $region12: #{encoder_modified_forward.4} parent=0 // pred_region
    _
  $region13: #{encoder_modified_forward.4} parent=0 // pred_fallthru
    _
  %v14 = vld [vmem:[%s0] sm:$0xff]
  %v15 = vld [vmem:[%s0 + $0x8] sm:$0xff]
  %v16 = vmul.f32 %v14, %v14
  %v17 = vmul.f32 %v15, %v15
  %vm18 = vcmask 261120
  %v19 = vsel %vm18, %v16, 0.0
  %20 = vadd.xlane.f32.xlu0 %v19
  %v21 = vpop.xlane.xlu0 %20
  %v22 = vsel %vm18, %v17, 0.0
  %23 = vadd.xlane.f32.xlu0 %v22
  %v24 = vpop.xlane.xlu0 %23
  %v25 = vmax.f32 %v21, 1e-24
  %v26 = vmax.f32 %v24, 1e-24
  %v27 = vrsqrt.pop %v25
  %v28 = vrsqrt.pop %v26
  %v29 = vld [vmem:[%s1] sm:$0xff]
  %v30 = vld [vmem:[%s1 + $0x8] sm:$0xff]
  %v31 = vld [vmem:[%s1 + $0x10] sm:$0xff]
  %v32 = vld [vmem:[%s1 + $0x18] sm:$0xff]
  %v34 = vsel %vm18, %v14, 0
  %v37 = vsel %vm18, %v15, 0
  %39 = vmatprep.subr.mxu0 0.0
  %40 = vmatpush1.msra.mxu0 %v29
  %41 = vmatprep.subr.mxu0 0.0
  %42 = vmatpush1.msra.mxu0 %v30
  %43 = vmatprep.subr.mxu0 0.0
  %44 = vmatpush1.msra.mxu0 %v31
  %45 = vmatprep.subr.mxu0 0.0
  %46 = vmatpush1.msra.mxu0 %v32
  %47 = vmatprep.subr.mxu0 0.0
  %48 = vmatpush1.msra.mxu0 0.0
  %49 = vmatprep.subr.mxu0 0.0
  %50 = vmatpush1.msra.mxu0 0.0
  %51 = vmatprep.subr.mxu0 0.0
  %52 = vmatpush1.msra.mxu0 0.0
  %53 = vmatprep.subr.mxu0 0.0
  %54 = vmatpush1.msra.mxu0 0.0
  %55 = vmatprep.subr.mxu0 0.0
  %56 = vmatpush1.msra.mxu0 0.0
  %57 = vmatprep.subr.mxu0 0.0
  %58 = vmatpush1.msra.mxu0 0.0
  %59 = vmatprep.subr.mxu0 0.0
  %60 = vmatpush1.msra.mxu0 0.0
  %61 = vmatprep.subr.mxu0 0.0
  %62 = vmatpush1.msra.mxu0 0.0
  %63 = vmatprep.subr.mxu0 0.0
  %64 = vmatpush1.msra.mxu0 0.0
  %65 = vmatprep.subr.mxu0 0.0
  %66 = vmatpush1.msra.mxu0 0.0
  %67 = vmatprep.subr.mxu0 0.0
  %68 = vmatpush1.msra.mxu0 0.0
  %69 = vmatprep.subr.mxu0 0.0
  %70 = vmatpush1.msra.mxu0 0.0
  %71 = vmatprep.subr.mxu0 0.0
  %72 = vmatpush1.msra.mxu0 0.0
  %73 = vmatprep.subr.mxu0 0.0
  %74 = vmatpush1.msra.mxu0 0.0
  %75 = vmatprep.subr.mxu0 0.0
  %76 = vmatpush1.msra.mxu0 0.0
  %77 = vmatprep.subr.mxu0 0.0
  %78 = vmatpush1.msra.mxu0 0.0
  %79 = vmatprep.subr.mxu0 0.0
  %80 = vmatpush1.msra.mxu0 0.0
  %81 = vmatprep.subr.mxu0 0.0
  %82 = vmatpush1.msra.mxu0 0.0
  %83 = vmatprep.subr.mxu0 0.0
  %84 = vmatpush1.msra.mxu0 0.0
  %85 = vmatprep.subr.mxu0 0.0
  %86 = vmatpush1.msra.mxu0 0.0
  %87 = vmatprep.subr.mxu0 0.0
  %88 = vmatpush1.msra.mxu0 0.0
  %89 = vmatprep.subr.mxu0 0.0
  %90 = vmatpush1.msra.mxu0 0.0
  %91 = vmatprep.subr.mxu0 0.0
  %92 = vmatpush1.msra.mxu0 0.0
  %93 = vmatprep.subr.mxu0 0.0
  %94 = vmatpush1.msra.mxu0 0.0
  %95 = vmatprep.subr.mxu0 0.0
  %96 = vmatpush1.msra.mxu0 0.0
  %97 = vmatprep.subr.mxu0 0.0
  %98 = vmatpush1.msra.mxu0 0.0
  %99 = vmatprep.subr.mxu0 0.0
  %100 = vmatpush1.msra.mxu0 0.0
  %101 = vmatprep.subr.mxu0 0.0
  %102 = vmatpush1.msra.mxu0 0.0
  %103 = vmatprep.mubr.f32.mxu0 0.0
  %104 = vmatmul.mubr.f32.gmra.mrb[0].mxu0 %v34
  %v105 = vpop.f32.mrb[0].mxu0
  %v106 = vadd.f32 0.0, %v105
  %v107 = vpop.f32.mrb[0].mxu0
  %108 = vmatprep.mubr.f32.mxu0 0.0
  %109 = vmatmul.mubr.f32.gmra.mrb[0].mxu0 %v37
  %v110 = vpop.f32.mrb[0].mxu0
  %v111 = vadd.f32 0.0, %v110
  %v112 = vpop.f32.mrb[0].mxu0
  %113 = vdwg.mxu0
  %v114 = vmul.f32 %v27, 10.0
  %v115 = vmul.f32 %v28, 10.0
  %v116 = vmul.f32 %v106, %v114
  %v117 = vmul.f32 %v111, %v115
  %v118 = vld [vmem:[%s2] sm:$0x1]
  %v120 = vlaneseq
  %v121 = vshrl.u32 %v120, 7
  %v122 = vsub.s32 0, %v121
  %v123 = vrot.slane %v118, %v122
  %v125 = vmul.f32 %v116, %v123
  %v126 = vmul.f32 %v117, %v123
  %127 = vst [vmem:[%s3] sm:$0xff] %v125
  %128 = vst [vmem:[%s3 + $0x8] sm:$0xff] %v126
  // Predicated region
  $region14: #{encoder_modified_forward.4} parent=0 // pred_check
    _
  $region15: #{encoder_modified_forward.4} parent=0 // pred_check_branch
    %130 = sbr.rel (0) target = $region17
  $region16: #{encoder_modified_forward.4} parent=0 // pred_region
    _
  $region17: #{encoder_modified_forward.4} parent=0 // pred_fallthru
    _
  // Predicated region
  $region18: #{encoder_modified_forward.4} parent=0 // pred_check
    _
  $region19: #{encoder_modified_forward.4} parent=0 // pred_check_branch
    %132 = sbr.rel (0) target = $region21
  $region20: #{encoder_modified_forward.4} parent=0 // pred_region
    _
  $region21: #{encoder_modified_forward.4} parent=0 // pred_fallthru
    _

// kernel: encoder_modified_forward.5
$region0: #{encoder_modified_forward.5}
  #allocation0 [shape = 'u32[]', space=smem, size = 0x4, offset = 0x4, fixed_abs, tag = 'smem constant byte address 0x4 - core index']
  #allocation1 [shape = 'u32[144,128]{1,0:T(1,128)}', space=vmem, size = 0x12000, scoped, tag = 'internal scratch']
  %s0 = inlined_call_operand.vmem [shape: f32[16,32], index: 0, kind: input, shape index: {}]
  %s1 = inlined_call_operand.vmem [shape: f32[32,128], index: 1, kind: input, shape index: {}]
  %s2 = inlined_call_operand.vmem [shape: f32[1,128], index: 2, kind: input, shape index: {}]
  %s3 = inlined_call_operand.hbm [shape: f32[16,128], index: 3, kind: output, shape index: {}]
  %s4 = sld [smem:[#allocation0]]
  $region22: #{encoder_modified_forward.5} parent=0
    _
  %s6 = ssub.s32 1, %s4
  %s7 = scalar_select 0, %s6, %s4
  $region1: #{encoder_modified_forward.5} parent=0
    #allocation2 [shape = 'u8[8192]{0}', space=vmem, size = 0x2000, scoped, tag = 'output window, operand 0, single buffered']
    #allocation3 [shape = 's32[1]{0}', space=sflag, size = 0x4, scoped, tag = 'scoped memory for encoder_modified_forward.5']
    %8 = vsyncpa [#allocation3], 0
    // Predicated region
    $region2: #{encoder_modified_forward.5} parent=1 // pred_check
      _
    $region3: #{encoder_modified_forward.5} parent=1 // pred_check_branch
      %10 = sbr.rel (0) target = $region5
    $region4: #{encoder_modified_forward.5} parent=1 // pred_region
      _
    $region5: #{encoder_modified_forward.5} parent=1 // pred_fallthru
      _
    // Predicated region
    $region6: #{encoder_modified_forward.5} parent=1 // pred_check
      _
    $region7: #{encoder_modified_forward.5} parent=1 // pred_check_branch
      %12 = sbr.rel (0) target = $region9
    $region8: #{encoder_modified_forward.5} parent=1 // pred_region
      _
    $region9: #{encoder_modified_forward.5} parent=1 // pred_fallthru
      _
    // Predicated region
    $region10: #{encoder_modified_forward.5} parent=1 // pred_check
      _
    $region11: #{encoder_modified_forward.5} parent=1 // pred_check_branch
      %14 = sbr.rel (0) target = $region13
    $region12: #{encoder_modified_forward.5} parent=1 // pred_region
      _
    $region13: #{encoder_modified_forward.5} parent=1 // pred_fallthru
      _
    %v15 = vld [vmem:[%s0] sm:$0xff]
    %v16 = vld [vmem:[%s0 + $0x8] sm:$0xff]
    %v17 = vmul.f32 %v15, %v15
    %v18 = vmul.f32 %v16, %v16
    %vm19 = vcmask 261120
    %v20 = vsel %vm19, %v17, 0.0
    %21 = vadd.xlane.f32.xlu0 %v20
    %v22 = vpop.xlane.xlu0 %21
    %v23 = vsel %vm19, %v18, 0.0
    %24 = vadd.xlane.f32.xlu0 %v23
    %v25 = vpop.xlane.xlu0 %24
    %v26 = vmax.f32 %v22, 1e-24
    %v27 = vmax.f32 %v25, 1e-24
    %v28 = vrsqrt.pop %v26
    %v29 = vrsqrt.pop %v27
    %v30 = vld [vmem:[%s1] sm:$0xff]
    %v31 = vld [vmem:[%s1 + $0x8] sm:$0xff]
    %v32 = vld [vmem:[%s1 + $0x10] sm:$0xff]
    %v33 = vld [vmem:[%s1 + $0x18] sm:$0xff]
    %v35 = vsel %vm19, %v15, 0
    %v38 = vsel %vm19, %v16, 0
    %40 = vmatprep.subr.mxu0 0.0
    %41 = vmatpush1.msra.mxu0 %v30
    %42 = vmatprep.subr.mxu0 0.0
    %43 = vmatpush1.msra.mxu0 %v31
    %44 = vmatprep.subr.mxu0 0.0
    %45 = vmatpush1.msra.mxu0 %v32
    %46 = vmatprep.subr.mxu0 0.0
    %47 = vmatpush1.msra.mxu0 %v33
    %48 = vmatprep.subr.mxu0 0.0
    %49 = vmatpush1.msra.mxu0 0.0
    %50 = vmatprep.subr.mxu0 0.0
    %51 = vmatpush1.msra.mxu0 0.0
    %52 = vmatprep.subr.mxu0 0.0
    %53 = vmatpush1.msra.mxu0 0.0
    %54 = vmatprep.subr.mxu0 0.0
    %55 = vmatpush1.msra.mxu0 0.0
    %56 = vmatprep.subr.mxu0 0.0
    %57 = vmatpush1.msra.mxu0 0.0
    %58 = vmatprep.subr.mxu0 0.0
    %59 = vmatpush1.msra.mxu0 0.0
    %60 = vmatprep.subr.mxu0 0.0
    %61 = vmatpush1.msra.mxu0 0.0
    %62 = vmatprep.subr.mxu0 0.0
    %63 = vmatpush1.msra.mxu0 0.0
    %64 = vmatprep.subr.mxu0 0.0
    %65 = vmatpush1.msra.mxu0 0.0
    %66 = vmatprep.subr.mxu0 0.0
    %67 = vmatpush1.msra.mxu0 0.0
    %68 = vmatprep.subr.mxu0 0.0
    %69 = vmatpush1.msra.mxu0 0.0
    %70 = vmatprep.subr.mxu0 0.0
    %71 = vmatpush1.msra.mxu0 0.0
    %72 = vmatprep.subr.mxu0 0.0
    %73 = vmatpush1.msra.mxu0 0.0
    %74 = vmatprep.subr.mxu0 0.0
    %75 = vmatpush1.msra.mxu0 0.0
    %76 = vmatprep.subr.mxu0 0.0
    %77 = vmatpush1.msra.mxu0 0.0
    %78 = vmatprep.subr.mxu0 0.0
    %79 = vmatpush1.msra.mxu0 0.0
    %80 = vmatprep.subr.mxu0 0.0
    %81 = vmatpush1.msra.mxu0 0.0
    %82 = vmatprep.subr.mxu0 0.0
    %83 = vmatpush1.msra.mxu0 0.0
    %84 = vmatprep.subr.mxu0 0.0
    %85 = vmatpush1.msra.mxu0 0.0
    %86 = vmatprep.subr.mxu0 0.0
    %87 = vmatpush1.msra.mxu0 0.0
    %88 = vmatprep.subr.mxu0 0.0
    %89 = vmatpush1.msra.mxu0 0.0
    %90 = vmatprep.subr.mxu0 0.0
    %91 = vmatpush1.msra.mxu0 0.0
    %92 = vmatprep.subr.mxu0 0.0
    %93 = vmatpush1.msra.mxu0 0.0
    %94 = vmatprep.subr.mxu0 0.0
    %95 = vmatpush1.msra.mxu0 0.0
    %96 = vmatprep.subr.mxu0 0.0
    %97 = vmatpush1.msra.mxu0 0.0
    %98 = vmatprep.subr.mxu0 0.0
    %99 = vmatpush1.msra.mxu0 0.0
    %100 = vmatprep.subr.mxu0 0.0
    %101 = vmatpush1.msra.mxu0 0.0
    %102 = vmatprep.subr.mxu0 0.0
    %103 = vmatpush1.msra.mxu0 0.0
    %104 = vmatprep.mubr.f32.mxu0 0.0
    %105 = vmatmul.mubr.f32.gmra.mrb[0].mxu0 %v35
    %v106 = vpop.f32.mrb[0].mxu0
    %v107 = vadd.f32 0.0, %v106
    %v108 = vpop.f32.mrb[0].mxu0
    %109 = vmatprep.mubr.f32.mxu0 0.0
    %110 = vmatmul.mubr.f32.gmra.mrb[0].mxu0 %v38
    %v111 = vpop.f32.mrb[0].mxu0
    %v112 = vadd.f32 0.0, %v111
    %v113 = vpop.f32.mrb[0].mxu0
    %114 = vdwg.mxu0
    %v115 = vmul.f32 %v28, 10.0
    %v116 = vmul.f32 %v29, 10.0
    %v117 = vmul.f32 %v107, %v115
    %v118 = vmul.f32 %v112, %v116
    %v119 = vld [vmem:[%s2] sm:$0x1]
    %v121 = vlaneseq
    %v122 = vshrl.u32 %v121, 7
    %v123 = vsub.s32 0, %v122
    %v124 = vrot.slane %v119, %v123
    %v126 = vmul.f32 %v117, %v124
    %v127 = vmul.f32 %v118, %v124
    %128 = vst [vmem:[#allocation2] sm:$0xff] %v126
    %129 = vst [vmem:[#allocation2 + $0x8] sm:$0xff] %v127
    // Predicated region
    $region14: #{encoder_modified_forward.5} parent=1 // pred_check
      _
    $region15: #{encoder_modified_forward.5} parent=1 // pred_check_branch
      %131 = sbr.rel (0) target = $region17
    $region16: #{encoder_modified_forward.5} parent=1 // pred_region
      %s133 = ssub.s32 256, 256
      %134 = vsyncadd [#allocation3], %s133
      %s135 = sshll.u32 [#allocation2], 4
      %s136 = int_to_ptr.vmem [resolvable:$true] %s135
      %141 = dma.vmem_to_hbm [thread:$0]  %s136, 256, %s3, [#allocation3], 128, 128, 8
    $region17: #{encoder_modified_forward.5} parent=1 // pred_fallthru
      _
    // Predicated region
    $region18: #{encoder_modified_forward.5} parent=1 // pred_check
      _
    $region19: #{encoder_modified_forward.5} parent=1 // pred_check_branch
      %143 = sbr.rel (0) target = $region21
    $region20: #{encoder_modified_forward.5} parent=1 // pred_region
      %144 = dma.done [#allocation3], 256
    $region21: #{encoder_modified_forward.5} parent=1 // pred_fallthru
      _
    %145 = vsyncpa [#allocation3], 1

</llo_original>
